<compile_context>
chip_gen: v7x
topology: tpu7x:2x2x1
jax: 0.10.0
libtpu: 0.0.40
codegen_flags: <defaults>
</compile_context>

<pallas_src>
import jax
import jax.numpy as jnp
from jax.experimental import pallas as pl
from jax.experimental.pallas import tpu as pltpu

LEAKY_SLOPE = 0.01  # F.leaky_relu default negative_slope
LANE = 128          # TPU vreg lane width


def _leaky_relu(x):
    return jnp.where(x >= 0, x, LEAKY_SLOPE * x)


def _round_up(x, m):
    return ((x + m - 1) // m) * m


def qnetwork_kernel(x_ref, w1_ref, b1_ref, w2_ref, b2_ref, w3_ref, b3_ref, out_ref):
    """Fused forward: leaky_relu(x@W1+b1) -> leaky_relu(.@W2+b2) -> .@W3+b3."""
    x = x_ref[...]  # already f32; no redundant cast

    h1 = jnp.dot(x, w1_ref[...], preferred_element_type=jnp.float32) + b1_ref[...]
    h1 = _leaky_relu(h1)

    h2 = jnp.dot(h1, w2_ref[...], preferred_element_type=jnp.float32) + b2_ref[...]
    h2 = _leaky_relu(h2)

    out = jnp.dot(h2, w3_ref[...], preferred_element_type=jnp.float32) + b3_ref[...]
    out_ref[...] = out.astype(out_ref.dtype)


def qnetwork_forward(state, params, *, tile_m=128):
    """state: (B, state_size) f32. params: dict of (w1,b1,w2,b2,w3,b3).

    Weights are stored as (in_features, out_features) so the kernel computes
    x @ W + b (PyTorch nn.Linear weights are transposed into this layout).
    """
    w1, b1, w2, b2, w3, b3 = (params[k] for k in ("w1", "b1", "w2", "b2", "w3", "b3"))
    B, state_size = state.shape
    h1_dim = w1.shape[1]
    h2_dim = w2.shape[1]
    action_size = w3.shape[1]

    # --- lane-dense output: pad last layer to a multiple of 128 columns ---
    n_pad = _round_up(action_size, LANE)
    w3p = jnp.pad(w3, ((0, 0), (0, n_pad - action_size)))
    b3p = jnp.pad(b3, ((0, 0), (0, n_pad - action_size)))

    # --- batch tiling: >= 8 (f32 sublanes), at most tile_m; pad batch to multiple ---
    tm = min(tile_m, _round_up(B, 8))
    b_pad = _round_up(B, tm)
    state_p = jnp.pad(state, ((0, b_pad - B), (0, 0))) if b_pad != B else state

    grid = (b_pad // tm,)

    # Resident (constant-block) specs for weights/biases.
    resident = lambda a: pl.BlockSpec(a.shape, lambda i: (0, 0))

    flops = 2 * b_pad * (state_size * h1_dim + h1_dim * h2_dim + h2_dim * n_pad)
    bytes_accessed = 4 * (
        b_pad * state_size            # input tiles
        + b_pad * n_pad               # output tiles
        + state_size * h1_dim + h1_dim    # w1, b1
        + h1_dim * h2_dim + h2_dim        # w2, b2
        + h2_dim * n_pad + n_pad          # w3, b3 (padded)
    )

    out_padded = pl.pallas_call(
        qnetwork_kernel,
        out_shape=jax.ShapeDtypeStruct((b_pad, n_pad), jnp.float32),
        grid_spec=pl.GridSpec(
            grid=grid,
            in_specs=[
                pl.BlockSpec((tm, state_size), lambda i: (i, 0)),  # state tile
                resident(w1), resident(b1),
                resident(w2), resident(b2),
                resident(w3p), resident(b3p),
            ],
            out_specs=pl.BlockSpec((tm, n_pad), lambda i: (i, 0)),
        ),
        compiler_params=pltpu.CompilerParams(
            dimension_semantics=("parallel",),
        ),
        cost_estimate=pl.CostEstimate(
            flops=flops, transcendentals=0, bytes_accessed=bytes_accessed
        ),
    )(state_p, w1, b1, w2, b2, w3p, b3p)

    return out_padded[:B, :action_size]


def init_params(key, state_size, action_size, hidden_dim=(64, 64)):
    """Deterministic init mimicking nn.Linear's U(-1/sqrt(fan_in), 1/sqrt(fan_in))."""
    dims = [state_size, hidden_dim[0], hidden_dim[1], action_size]
    params = {}
    keys = jax.random.split(key, 6)
    for i in range(3):
        fan_in = dims[i]
        bound = 1.0 / jnp.sqrt(jnp.float32(fan_in))
        w = jax.random.uniform(keys[2 * i], (dims[i], dims[i + 1]),
                               minval=-bound, maxval=bound, dtype=jnp.float32)
        b = jax.random.uniform(keys[2 * i + 1], (1, dims[i + 1]),
                               minval=-bound, maxval=bound, dtype=jnp.float32)
        params[f"w{i + 1}"] = w
        params[f"b{i + 1}"] = b
    return params


def _reference_forward(state, params):
    h = _leaky_relu(state @ params["w1"] + params["b1"])
    h = _leaky_relu(h @ params["w2"] + params["b2"])
    return h @ params["w3"] + params["b3"]


if __name__ == "__main__":
    key = jax.random.PRNGKey(0)
    k_params, k_state = jax.random.split(key)

    batch = 2
    state_size = 8
    action_size = 4

    params = init_params(k_params, state_size, action_size, hidden_dim=(64, 64))
    state = jax.random.normal(k_state, (batch, state_size), dtype=jnp.float32)

    q_values = qnetwork_forward(state, params)
    jax.block_until_ready(q_values)

    ref = _reference_forward(state, params)
    assert q_values.shape == (batch, action_size)
    assert jnp.allclose(q_values, ref, atol=1e-5), "mismatch vs reference"

    # Also exercise a larger, tile-spanning batch (non-divisible by the tile).
    big_state = jax.random.normal(jax.random.PRNGKey(1), (300, state_size),
                                  dtype=jnp.float32)
    big_q = qnetwork_forward(big_state, params, tile_m=128)
    jax.block_until_ready(big_q)
    big_ref = _reference_forward(big_state, params)
    assert big_q.shape == (300, action_size)
    assert jnp.allclose(big_q, big_ref, atol=1e-5), "mismatch vs reference (big batch)"

    print("KERNEL_OK")
</pallas_src>

<mosaic_0001>
module attributes {stable_mosaic.version = 11 : i64} {
  func.func @qnetwork_kernel(%arg0: i32, %arg1: memref<8x8xf32, #tpu.memory_space<vmem>>, %arg2: memref<8x64xf32, #tpu.memory_space<vmem>>, %arg3: memref<1x64xf32, #tpu.memory_space<vmem>>, %arg4: memref<64x64xf32, #tpu.memory_space<vmem>>, %arg5: memref<1x64xf32, #tpu.memory_space<vmem>>, %arg6: memref<64x128xf32, #tpu.memory_space<vmem>>, %arg7: memref<1x128xf32, #tpu.memory_space<vmem>>, %arg8: memref<8x128xf32, #tpu.memory_space<vmem>>) attributes {dimension_semantics = [#tpu.dimension_semantics<parallel>], iteration_bounds = array<i64: 1>, scalar_prefetch = 0 : i64, scratch_operands = 0 : i64, tpu.core_type = #tpu.core_type<tc>, window_params = [{transform_indices = @transform_0, window_bounds = array<i64: 8, 8>}, {pipeline_mode = #tpu.pipeline_mode<synchronous>, transform_indices = @transform_1, window_bounds = array<i64: 8, 64>}, {pipeline_mode = #tpu.pipeline_mode<synchronous>, transform_indices = @transform_2, window_bounds = array<i64: 1, 64>}, {pipeline_mode = #tpu.pipeline_mode<synchronous>, transform_indices = @transform_3, window_bounds = array<i64: 64, 64>}, {pipeline_mode = #tpu.pipeline_mode<synchronous>, transform_indices = @transform_4, window_bounds = array<i64: 1, 64>}, {pipeline_mode = #tpu.pipeline_mode<synchronous>, transform_indices = @transform_5, window_bounds = array<i64: 64, 128>}, {pipeline_mode = #tpu.pipeline_mode<synchronous>, transform_indices = @transform_6, window_bounds = array<i64: 1, 128>}, {transform_indices = @transform_7, window_bounds = array<i64: 8, 128>}]} {
    %c0 = arith.constant 0 : index
    %c0_0 = arith.constant 0 : index
    %0 = vector.load %arg1[%c0, %c0_0] : memref<8x8xf32, #tpu.memory_space<vmem>>, vector<8x8xf32>
    %c0_1 = arith.constant 0 : index
    %c0_2 = arith.constant 0 : index
    %1 = vector.load %arg2[%c0_1, %c0_2] : memref<8x64xf32, #tpu.memory_space<vmem>>, vector<8x64xf32>
    %cst = arith.constant dense<0.000000e+00> : vector<8x64xf32>
    %2 = tpu.matmul %0, %1, %cst {dimension_numbers = #tpu.dot_dimension_numbers<[1], [0], [0], [1], [0, 0, 1, 1], [], []>} : vector<8x8xf32>, vector<8x64xf32>, vector<8x64xf32> -> vector<8x64xf32>
    %c0_3 = arith.constant 0 : index
    %c0_4 = arith.constant 0 : index
    %3 = vector.load %arg3[%c0_3, %c0_4] : memref<1x64xf32, #tpu.memory_space<vmem>>, vector<1x64xf32>
    %4 = vector.broadcast %3 : vector<1x64xf32> to vector<8x64xf32>
    %5 = arith.addf %2, %4 : vector<8x64xf32>
    %cst_5 = arith.constant 0.000000e+00 : f32
    %6 = vector.broadcast %cst_5 : f32 to vector<8x64xf32>
    %7 = arith.cmpf oge, %5, %6 : vector<8x64xf32>
    %cst_6 = arith.constant 0.00999999977 : f32
    %8 = vector.broadcast %cst_6 : f32 to vector<8x64xf32>
    %9 = arith.mulf %8, %5 : vector<8x64xf32>
    %10 = arith.select %7, %5, %9 : vector<8x64xi1>, vector<8x64xf32>
    %c0_7 = arith.constant 0 : index
    %c0_8 = arith.constant 0 : index
    %11 = vector.load %arg4[%c0_7, %c0_8] : memref<64x64xf32, #tpu.memory_space<vmem>>, vector<64x64xf32>
    %cst_9 = arith.constant dense<0.000000e+00> : vector<8x64xf32>
    %12 = tpu.matmul %10, %11, %cst_9 {dimension_numbers = #tpu.dot_dimension_numbers<[1], [0], [0], [1], [0, 0, 1, 1], [], []>} : vector<8x64xf32>, vector<64x64xf32>, vector<8x64xf32> -> vector<8x64xf32>
    %c0_10 = arith.constant 0 : index
    %c0_11 = arith.constant 0 : index
    %13 = vector.load %arg5[%c0_10, %c0_11] : memref<1x64xf32, #tpu.memory_space<vmem>>, vector<1x64xf32>
    %14 = vector.broadcast %13 : vector<1x64xf32> to vector<8x64xf32>
    %15 = arith.addf %12, %14 : vector<8x64xf32>
    %cst_12 = arith.constant 0.000000e+00 : f32
    %16 = vector.broadcast %cst_12 : f32 to vector<8x64xf32>
    %17 = arith.cmpf oge, %15, %16 : vector<8x64xf32>
    %cst_13 = arith.constant 0.00999999977 : f32
    %18 = vector.broadcast %cst_13 : f32 to vector<8x64xf32>
    %19 = arith.mulf %18, %15 : vector<8x64xf32>
    %20 = arith.select %17, %15, %19 : vector<8x64xi1>, vector<8x64xf32>
    %c0_14 = arith.constant 0 : index
    %c0_15 = arith.constant 0 : index
    %21 = vector.load %arg6[%c0_14, %c0_15] : memref<64x128xf32, #tpu.memory_space<vmem>>, vector<64x128xf32>
    %cst_16 = arith.constant dense<0.000000e+00> : vector<8x128xf32>
    %22 = tpu.matmul %20, %21, %cst_16 {dimension_numbers = #tpu.dot_dimension_numbers<[1], [0], [0], [1], [0, 0, 1, 1], [], []>} : vector<8x64xf32>, vector<64x128xf32>, vector<8x128xf32> -> vector<8x128xf32>
    %c0_17 = arith.constant 0 : index
    %c0_18 = arith.constant 0 : index
    %23 = vector.load %arg7[%c0_17, %c0_18] : memref<1x128xf32, #tpu.memory_space<vmem>>, vector<1x128xf32>
    %24 = vector.broadcast %23 : vector<1x128xf32> to vector<8x128xf32>
    %25 = arith.addf %22, %24 : vector<8x128xf32>
    %c0_19 = arith.constant 0 : index
    %c0_20 = arith.constant 0 : index
    %26 = vector.load %arg8[%c0_19, %c0_20] : memref<8x128xf32, #tpu.memory_space<vmem>>, vector<8x128xf32>
    tpu.vector_store %arg8[%c0_19, %c0_20], %25 {strides = array<i32>} : memref<8x128xf32, #tpu.memory_space<vmem>>, vector<8x128xf32>,
    return
  }
  func.func @transform_0(%arg0: i32) -> (i32, i32) {
    %c0_i32 = arith.constant 0 : i32
    %c0_i32_0 = arith.constant 0 : i32
    return %arg0, %c0_i32 : i32, i32
  }
  func.func @transform_1(%arg0: i32) -> (i32, i32) {
    %c0_i32 = arith.constant 0 : i32
    %c0_i32_0 = arith.constant 0 : i32
    %c0_i32_1 = arith.constant 0 : i32
    return %c0_i32, %c0_i32_0 : i32, i32
  }
  func.func @transform_2(%arg0: i32) -> (i32, i32) {
    %c0_i32 = arith.constant 0 : i32
    %c0_i32_0 = arith.constant 0 : i32
    %c0_i32_1 = arith.constant 0 : i32
    return %c0_i32, %c0_i32_0 : i32, i32
  }
  func.func @transform_3(%arg0: i32) -> (i32, i32) {
    %c0_i32 = arith.constant 0 : i32
    %c0_i32_0 = arith.constant 0 : i32
    %c0_i32_1 = arith.constant 0 : i32
    return %c0_i32, %c0_i32_0 : i32, i32
  }
  func.func @transform_4(%arg0: i32) -> (i32, i32) {
    %c0_i32 = arith.constant 0 : i32
    %c0_i32_0 = arith.constant 0 : i32
    %c0_i32_1 = arith.constant 0 : i32
    return %c0_i32, %c0_i32_0 : i32, i32
  }
  func.func @transform_5(%arg0: i32) -> (i32, i32) {
    %c0_i32 = arith.constant 0 : i32
    %c0_i32_0 = arith.constant 0 : i32
    %c0_i32_1 = arith.constant 0 : i32
    return %c0_i32, %c0_i32_0 : i32, i32
  }
  func.func @transform_6(%arg0: i32) -> (i32, i32) {
    %c0_i32 = arith.constant 0 : i32
    %c0_i32_0 = arith.constant 0 : i32
    %c0_i32_1 = arith.constant 0 : i32
    return %c0_i32, %c0_i32_0 : i32, i32
  }
  func.func @transform_7(%arg0: i32) -> (i32, i32) {
    %c0_i32 = arith.constant 0 : i32
    %c0_i32_0 = arith.constant 0 : i32
    return %arg0, %c0_i32 : i32, i32
  }
}

</mosaic_0001>

<llo_original>
// kernel: tpu_custom_call.1
$region0: #{tpu_custom_call.1}
  #allocation0 [shape = 'u32[]', space=smem, size = 0x4, offset = 0x4, fixed_abs, tag = 'smem constant byte address 0x4 - core index']
  #allocation1 [shape = 'u32[144,128]{1,0:T(1,128)}', space=vmem, size = 0x12000, scoped, tag = 'internal scratch']
  %s0 = inlined_call_operand.hbm [shape: f32[8,8], index: 0, kind: input, shape index: {}]
  %s1 = inlined_call_operand.hbm [shape: f32[8,64], index: 1, kind: input, shape index: {}]
  %s2 = inlined_call_operand.vmem [shape: f32[1,64], index: 2, kind: input, shape index: {}]
  %s3 = inlined_call_operand.hbm [shape: f32[64,64], index: 3, kind: input, shape index: {}]
  %s4 = inlined_call_operand.vmem [shape: f32[1,64], index: 4, kind: input, shape index: {}]
  %s5 = inlined_call_operand.hbm [shape: f32[64,128], index: 5, kind: input, shape index: {}]
  %s6 = inlined_call_operand.vmem [shape: f32[1,128], index: 6, kind: input, shape index: {}]
  %s7 = inlined_call_operand.hbm [shape: f32[8,128], index: 7, kind: output, shape index: {}]
  %s8 = sld [smem:[#allocation0]]
  $region54: #{tpu_custom_call.1} parent=0
    _
  %s10 = ssub.s32 1, %s8
  %s11 = scalar_select 0, %s10, %s8
  $region1: #{tpu_custom_call.1} parent=0
    #allocation2 [shape = 'u8[4096]{0}', space=vmem, size = 0x1000, scoped, tag = 'input window, operand 0, single buffered']
    #allocation3 [shape = 's32[1]{0}', space=sflag, size = 0x4, scoped, tag = 'scoped memory for tpu_custom_call.1']
    #allocation4 [shape = 's32[1]{0}', space=sflag, size = 0x4, scoped, tag = 'scoped memory for tpu_custom_call.1']
    #allocation5 [shape = 'u8[4096]{0}', space=vmem, size = 0x1000, scoped, tag = 'input window, operand 1, single buffered']
    #allocation6 [shape = 's32[1]{0}', space=sflag, size = 0x4, scoped, tag = 'scoped memory for tpu_custom_call.1']
    #allocation7 [shape = 'u8[32768]{0}', space=vmem, size = 0x8000, scoped, tag = 'input window, operand 3, single buffered']
    #allocation8 [shape = 'u8[32768]{0}', space=vmem, size = 0x8000, scoped, tag = 'input window, operand 5, single buffered']
    #allocation9 [shape = 's32[1]{0}', space=sflag, size = 0x4, scoped, tag = 'scoped memory for tpu_custom_call.1']
    #allocation10 [shape = 'u8[4096]{0}', space=vmem, size = 0x1000, scoped, tag = 'output window, operand 0, single buffered']
    %12 = vsyncpa [#allocation3], 0
    %13 = vsyncpa [#allocation6], 0
    %14 = vsyncpa [#allocation9], 0
    %15 = vsyncpa [#allocation4], 0
    // Predicated region
    $region2: #{tpu_custom_call.1} parent=1 // pred_check
      _
    $region3: #{tpu_custom_call.1} parent=1 // pred_check_branch
      %17 = sbr.rel (0) target = $region5
    $region4: #{tpu_custom_call.1} parent=1 // pred_region
      %s19 = ssub.s32 128, 128
      %20 = vsyncadd [#allocation3], %s19
      %s22 = sshll.u32 [#allocation2], 4
      %s23 = int_to_ptr.vmem [resolvable:$true] %s22
      %25 = dma.hbm_to_vmem [thread:$0]  %s0, 128, %s23, [#allocation3]
    $region5: #{tpu_custom_call.1} parent=1 // pred_fallthru
      _
    // Predicated region
    $region6: #{tpu_custom_call.1} parent=1 // pred_check
      _
    $region7: #{tpu_custom_call.1} parent=1 // pred_check_branch
      %27 = sbr.rel (0) target = $region9
    $region8: #{tpu_custom_call.1} parent=1 // pred_region
      %s29 = ssub.s32 128, 128
      %30 = vsyncadd [#allocation6], %s29
      %s32 = sshll.u32 [#allocation5], 4
      %s33 = int_to_ptr.vmem [resolvable:$true] %s32
      %35 = dma.hbm_to_vmem [thread:$0]  %s1, 128, %s33, [#allocation6]
    $region9: #{tpu_custom_call.1} parent=1 // pred_fallthru
      _
    // Predicated region
    $region10: #{tpu_custom_call.1} parent=1 // pred_check
      _
    $region11: #{tpu_custom_call.1} parent=1 // pred_check_branch
      %37 = sbr.rel (0) target = $region13
    $region12: #{tpu_custom_call.1} parent=1 // pred_region
      _
    $region13: #{tpu_custom_call.1} parent=1 // pred_fallthru
      _
    // Predicated region
    $region14: #{tpu_custom_call.1} parent=1 // pred_check
      _
    $region15: #{tpu_custom_call.1} parent=1 // pred_check_branch
      %39 = sbr.rel (0) target = $region17
    $region16: #{tpu_custom_call.1} parent=1 // pred_region
      %s41 = ssub.s32 1024, 1024
      %42 = vsyncadd [#allocation6], %s41
      %s43 = sshll.u32 [#allocation7], 4
      %s44 = int_to_ptr.vmem [resolvable:$true] %s43
      %49 = dma.hbm_to_vmem [thread:$0]  %s3, 1024, %s44, [#allocation6], 128, 128, 8
    $region17: #{tpu_custom_call.1} parent=1 // pred_fallthru
      _
    // Predicated region
    $region18: #{tpu_custom_call.1} parent=1 // pred_check
      _
    $region19: #{tpu_custom_call.1} parent=1 // pred_check_branch
      %51 = sbr.rel (0) target = $region21
    $region20: #{tpu_custom_call.1} parent=1 // pred_region
      _
    $region21: #{tpu_custom_call.1} parent=1 // pred_fallthru
      _
    // Predicated region
    $region22: #{tpu_custom_call.1} parent=1 // pred_check
      _
    $region23: #{tpu_custom_call.1} parent=1 // pred_check_branch
      %53 = sbr.rel (0) target = $region25
    $region24: #{tpu_custom_call.1} parent=1 // pred_region
      %s55 = ssub.s32 1024, 1024
      %56 = vsyncadd [#allocation9], %s55
      %s57 = sshll.u32 [#allocation8], 4
      %s58 = int_to_ptr.vmem [resolvable:$true] %s57
      %63 = dma.hbm_to_vmem [thread:$0]  %s5, 1024, %s58, [#allocation9], 128, 128, 8
    $region25: #{tpu_custom_call.1} parent=1 // pred_fallthru
      _
    // Predicated region
    $region26: #{tpu_custom_call.1} parent=1 // pred_check
      _
    $region27: #{tpu_custom_call.1} parent=1 // pred_check_branch
      %65 = sbr.rel (0) target = $region29
    $region28: #{tpu_custom_call.1} parent=1 // pred_region
      _
    $region29: #{tpu_custom_call.1} parent=1 // pred_fallthru
      _
    // Predicated region
    $region30: #{tpu_custom_call.1} parent=1 // pred_check
      _
    $region31: #{tpu_custom_call.1} parent=1 // pred_check_branch
      %67 = sbr.rel (0) target = $region33
    $region32: #{tpu_custom_call.1} parent=1 // pred_region
      %68 = dma.done [#allocation3], 128
    $region33: #{tpu_custom_call.1} parent=1 // pred_fallthru
      _
    // Predicated region
    $region34: #{tpu_custom_call.1} parent=1 // pred_check
      _
    $region35: #{tpu_custom_call.1} parent=1 // pred_check_branch
      %70 = sbr.rel (0) target = $region37
    $region36: #{tpu_custom_call.1} parent=1 // pred_region
      %71 = dma.done [#allocation6], 128
    $region37: #{tpu_custom_call.1} parent=1 // pred_fallthru
      _
    // Predicated region
    $region38: #{tpu_custom_call.1} parent=1 // pred_check
      _
    $region39: #{tpu_custom_call.1} parent=1 // pred_check_branch
      %73 = sbr.rel (0) target = $region41
    $region40: #{tpu_custom_call.1} parent=1 // pred_region
      %74 = dma.done [#allocation6], 1024
    $region41: #{tpu_custom_call.1} parent=1 // pred_fallthru
      _
    // Predicated region
    $region42: #{tpu_custom_call.1} parent=1 // pred_check
      _
    $region43: #{tpu_custom_call.1} parent=1 // pred_check_branch
      %76 = sbr.rel (0) target = $region45
    $region44: #{tpu_custom_call.1} parent=1 // pred_region
      %77 = dma.done [#allocation9], 1024
    $region45: #{tpu_custom_call.1} parent=1 // pred_fallthru
      _
    %v78 = vld [vmem:[#allocation2] sm:$0xff]
    %v79 = vld [vmem:[#allocation5] sm:$0xff]
    %v80 = vld [vmem:[%s2] sm:$0x1]
    %v82 = vlaneseq
    %v83 = vshrl.u32 %v82, 7
    %v84 = vsub.s32 0, %v83
    %v85 = vrot.slane %v80, %v84
    %vm87 = vcmask 64512
    %v89 = vsel %vm87, %v78, 0
    %91 = vmatprep.subr.mxu0 0.0
    %92 = vmatpush1.msra.mxu0 %v79
    %93 = vmatprep.subr.mxu0 0.0
    %94 = vmatpush1.msra.mxu0 0.0
    %95 = vmatprep.subr.mxu0 0.0
    %96 = vmatpush1.msra.mxu0 0.0
    %97 = vmatprep.subr.mxu0 0.0
    %98 = vmatpush1.msra.mxu0 0.0
    %99 = vmatprep.subr.mxu0 0.0
    %100 = vmatpush1.msra.mxu0 0.0
    %101 = vmatprep.subr.mxu0 0.0
    %102 = vmatpush1.msra.mxu0 0.0
    %103 = vmatprep.subr.mxu0 0.0
    %104 = vmatpush1.msra.mxu0 0.0
    %105 = vmatprep.subr.mxu0 0.0
    %106 = vmatpush1.msra.mxu0 0.0
    %107 = vmatprep.subr.mxu0 0.0
    %108 = vmatpush1.msra.mxu0 0.0
    %109 = vmatprep.subr.mxu0 0.0
    %110 = vmatpush1.msra.mxu0 0.0
    %111 = vmatprep.subr.mxu0 0.0
    %112 = vmatpush1.msra.mxu0 0.0
    %113 = vmatprep.subr.mxu0 0.0
    %114 = vmatpush1.msra.mxu0 0.0
    %115 = vmatprep.subr.mxu0 0.0
    %116 = vmatpush1.msra.mxu0 0.0
    %117 = vmatprep.subr.mxu0 0.0
    %118 = vmatpush1.msra.mxu0 0.0
    %119 = vmatprep.subr.mxu0 0.0
    %120 = vmatpush1.msra.mxu0 0.0
    %121 = vmatprep.subr.mxu0 0.0
    %122 = vmatpush1.msra.mxu0 0.0
    %123 = vmatprep.subr.mxu0 0.0
    %124 = vmatpush1.msra.mxu0 0.0
    %125 = vmatprep.subr.mxu0 0.0
    %126 = vmatpush1.msra.mxu0 0.0
    %127 = vmatprep.subr.mxu0 0.0
    %128 = vmatpush1.msra.mxu0 0.0
    %129 = vmatprep.subr.mxu0 0.0
    %130 = vmatpush1.msra.mxu0 0.0
    %131 = vmatprep.subr.mxu0 0.0
    %132 = vmatpush1.msra.mxu0 0.0
    %133 = vmatprep.subr.mxu0 0.0
    %134 = vmatpush1.msra.mxu0 0.0
    %135 = vmatprep.subr.mxu0 0.0
    %136 = vmatpush1.msra.mxu0 0.0
    %137 = vmatprep.subr.mxu0 0.0
    %138 = vmatpush1.msra.mxu0 0.0
    %139 = vmatprep.subr.mxu0 0.0
    %140 = vmatpush1.msra.mxu0 0.0
    %141 = vmatprep.subr.mxu0 0.0
    %142 = vmatpush1.msra.mxu0 0.0
    %143 = vmatprep.subr.mxu0 0.0
    %144 = vmatpush1.msra.mxu0 0.0
    %145 = vmatprep.subr.mxu0 0.0
    %146 = vmatpush1.msra.mxu0 0.0
    %147 = vmatprep.subr.mxu0 0.0
    %148 = vmatpush1.msra.mxu0 0.0
    %149 = vmatprep.subr.mxu0 0.0
    %150 = vmatpush1.msra.mxu0 0.0
    %151 = vmatprep.subr.mxu0 0.0
    %152 = vmatpush1.msra.mxu0 0.0
    %153 = vmatprep.subr.mxu0 0.0
    %154 = vmatpush1.msra.mxu0 0.0
    %155 = vmatprep.mubr.f32.mxu0 0.0
    %156 = vmatmul.mubr.f32.gmra.mrb[0].mxu0 %v89
    %v157 = vpop.f32.mrb[0].mxu0
    %v158 = vadd.f32 %v85, %v157
    %v159 = vpop.f32.mrb[0].mxu0
    %160 = vdwg.mxu0
    %vm161 = vcmp.ge.f32.partialorder %v158, 0.0
    %v162 = vmul.f32 %v158, 0.01
    %v163 = vsel %vm161, %v158, %v162
    %v164 = vld [vmem:[#allocation7] sm:$0xff]
    %v165 = vld [vmem:[#allocation7 + $0x8] sm:$0xff]
    %v166 = vld [vmem:[#allocation7 + $0x10] sm:$0xff]
    %v167 = vld [vmem:[#allocation7 + $0x18] sm:$0xff]
    %v168 = vld [vmem:[#allocation7 + $0x20] sm:$0xff]
    %v169 = vld [vmem:[#allocation7 + $0x28] sm:$0xff]
    %v170 = vld [vmem:[#allocation7 + $0x30] sm:$0xff]
    %v171 = vld [vmem:[#allocation7 + $0x38] sm:$0xff]
    %v172 = vld [vmem:[%s4] sm:$0x1]
    %v174 = vlaneseq
    %v175 = vshrl.u32 %v174, 7
    %v176 = vsub.s32 0, %v175
    %v177 = vrot.slane %v172, %v176
    %vm179 = vcmask 523264
    %v181 = vsel %vm179, %v163, 0
    %183 = vmatprep.subr.mxu0 0.0
    %184 = vmatpush1.msra.mxu0 %v164
    %185 = vmatprep.subr.mxu0 0.0
    %186 = vmatpush1.msra.mxu0 %v165
    %187 = vmatprep.subr.mxu0 0.0
    %188 = vmatpush1.msra.mxu0 %v166
    %189 = vmatprep.subr.mxu0 0.0
    %190 = vmatpush1.msra.mxu0 %v167
    %191 = vmatprep.subr.mxu0 0.0
    %192 = vmatpush1.msra.mxu0 %v168
    %193 = vmatprep.subr.mxu0 0.0
    %194 = vmatpush1.msra.mxu0 %v169
    %195 = vmatprep.subr.mxu0 0.0
    %196 = vmatpush1.msra.mxu0 %v170
    %197 = vmatprep.subr.mxu0 0.0
    %198 = vmatpush1.msra.mxu0 %v171
    %199 = vmatprep.subr.mxu0 0.0
    %200 = vmatpush1.msra.mxu0 0.0
    %201 = vmatprep.subr.mxu0 0.0
    %202 = vmatpush1.msra.mxu0 0.0
    %203 = vmatprep.subr.mxu0 0.0
    %204 = vmatpush1.msra.mxu0 0.0
    %205 = vmatprep.subr.mxu0 0.0
    %206 = vmatpush1.msra.mxu0 0.0
    %207 = vmatprep.subr.mxu0 0.0
    %208 = vmatpush1.msra.mxu0 0.0
    %209 = vmatprep.subr.mxu0 0.0
    %210 = vmatpush1.msra.mxu0 0.0
    %211 = vmatprep.subr.mxu0 0.0
    %212 = vmatpush1.msra.mxu0 0.0
    %213 = vmatprep.subr.mxu0 0.0
    %214 = vmatpush1.msra.mxu0 0.0
    %215 = vmatprep.subr.mxu0 0.0
    %216 = vmatpush1.msra.mxu0 0.0
    %217 = vmatprep.subr.mxu0 0.0
    %218 = vmatpush1.msra.mxu0 0.0
    %219 = vmatprep.subr.mxu0 0.0
    %220 = vmatpush1.msra.mxu0 0.0
    %221 = vmatprep.subr.mxu0 0.0
    %222 = vmatpush1.msra.mxu0 0.0
    %223 = vmatprep.subr.mxu0 0.0
    %224 = vmatpush1.msra.mxu0 0.0
    %225 = vmatprep.subr.mxu0 0.0
    %226 = vmatpush1.msra.mxu0 0.0
    %227 = vmatprep.subr.mxu0 0.0
    %228 = vmatpush1.msra.mxu0 0.0
    %229 = vmatprep.subr.mxu0 0.0
    %230 = vmatpush1.msra.mxu0 0.0
    %231 = vmatprep.subr.mxu0 0.0
    %232 = vmatpush1.msra.mxu0 0.0
    %233 = vmatprep.subr.mxu0 0.0
    %234 = vmatpush1.msra.mxu0 0.0
    %235 = vmatprep.subr.mxu0 0.0
    %236 = vmatpush1.msra.mxu0 0.0
    %237 = vmatprep.subr.mxu0 0.0
    %238 = vmatpush1.msra.mxu0 0.0
    %239 = vmatprep.subr.mxu0 0.0
    %240 = vmatpush1.msra.mxu0 0.0
    %241 = vmatprep.subr.mxu0 0.0
    %242 = vmatpush1.msra.mxu0 0.0
    %243 = vmatprep.subr.mxu0 0.0
    %244 = vmatpush1.msra.mxu0 0.0
    %245 = vmatprep.subr.mxu0 0.0
    %246 = vmatpush1.msra.mxu0 0.0
    %247 = vmatprep.mubr.f32.mxu0 0.0
    %248 = vmatmul.mubr.f32.gmra.mrb[0].mxu0 %v181
    %v249 = vpop.f32.mrb[0].mxu0
    %v250 = vadd.f32 %v177, %v249
    %v251 = vpop.f32.mrb[0].mxu0
    %252 = vdwg.mxu0
    %vm253 = vcmp.ge.f32.partialorder %v250, 0.0
    %v254 = vmul.f32 %v250, 0.01
    %v255 = vsel %vm253, %v250, %v254
    %v256 = vld [vmem:[#allocation8] sm:$0xff]
    %v257 = vld [vmem:[#allocation8 + $0x8] sm:$0xff]
    %v258 = vld [vmem:[#allocation8 + $0x10] sm:$0xff]
    %v259 = vld [vmem:[#allocation8 + $0x18] sm:$0xff]
    %v260 = vld [vmem:[#allocation8 + $0x20] sm:$0xff]
    %v261 = vld [vmem:[#allocation8 + $0x28] sm:$0xff]
    %v262 = vld [vmem:[#allocation8 + $0x30] sm:$0xff]
    %v263 = vld [vmem:[#allocation8 + $0x38] sm:$0xff]
    %v264 = vld [vmem:[%s6] sm:$0x1]
    %v266 = vlaneseq
    %v267 = vshrl.u32 %v266, 7
    %v268 = vsub.s32 0, %v267
    %v269 = vrot.slane %v264, %v268
    %v272 = vsel %vm179, %v255, 0
    %274 = vmatprep.subr.mxu0 0.0
    %275 = vmatpush1.msra.mxu0 %v256
    %276 = vmatprep.subr.mxu0 0.0
    %277 = vmatpush1.msra.mxu0 %v257
    %278 = vmatprep.subr.mxu0 0.0
    %279 = vmatpush1.msra.mxu0 %v258
    %280 = vmatprep.subr.mxu0 0.0
    %281 = vmatpush1.msra.mxu0 %v259
    %282 = vmatprep.subr.mxu0 0.0
    %283 = vmatpush1.msra.mxu0 %v260
    %284 = vmatprep.subr.mxu0 0.0
    %285 = vmatpush1.msra.mxu0 %v261
    %286 = vmatprep.subr.mxu0 0.0
    %287 = vmatpush1.msra.mxu0 %v262
    %288 = vmatprep.subr.mxu0 0.0
    %289 = vmatpush1.msra.mxu0 %v263
    %290 = vmatprep.subr.mxu0 0.0
    %291 = vmatpush1.msra.mxu0 0.0
    %292 = vmatprep.subr.mxu0 0.0
    %293 = vmatpush1.msra.mxu0 0.0
    %294 = vmatprep.subr.mxu0 0.0
    %295 = vmatpush1.msra.mxu0 0.0
    %296 = vmatprep.subr.mxu0 0.0
    %297 = vmatpush1.msra.mxu0 0.0
    %298 = vmatprep.subr.mxu0 0.0
    %299 = vmatpush1.msra.mxu0 0.0
    %300 = vmatprep.subr.mxu0 0.0
    %301 = vmatpush1.msra.mxu0 0.0
    %302 = vmatprep.subr.mxu0 0.0
    %303 = vmatpush1.msra.mxu0 0.0
    %304 = vmatprep.subr.mxu0 0.0
    %305 = vmatpush1.msra.mxu0 0.0
    %306 = vmatprep.subr.mxu0 0.0
    %307 = vmatpush1.msra.mxu0 0.0
    %308 = vmatprep.subr.mxu0 0.0
    %309 = vmatpush1.msra.mxu0 0.0
    %310 = vmatprep.subr.mxu0 0.0
    %311 = vmatpush1.msra.mxu0 0.0
    %312 = vmatprep.subr.mxu0 0.0
    %313 = vmatpush1.msra.mxu0 0.0
    %314 = vmatprep.subr.mxu0 0.0
    %315 = vmatpush1.msra.mxu0 0.0
    %316 = vmatprep.subr.mxu0 0.0
    %317 = vmatpush1.msra.mxu0 0.0
    %318 = vmatprep.subr.mxu0 0.0
    %319 = vmatpush1.msra.mxu0 0.0
    %320 = vmatprep.subr.mxu0 0.0
    %321 = vmatpush1.msra.mxu0 0.0
    %322 = vmatprep.subr.mxu0 0.0
    %323 = vmatpush1.msra.mxu0 0.0
    %324 = vmatprep.subr.mxu0 0.0
    %325 = vmatpush1.msra.mxu0 0.0
    %326 = vmatprep.subr.mxu0 0.0
    %327 = vmatpush1.msra.mxu0 0.0
    %328 = vmatprep.subr.mxu0 0.0
    %329 = vmatpush1.msra.mxu0 0.0
    %330 = vmatprep.subr.mxu0 0.0
    %331 = vmatpush1.msra.mxu0 0.0
    %332 = vmatprep.subr.mxu0 0.0
    %333 = vmatpush1.msra.mxu0 0.0
    %334 = vmatprep.subr.mxu0 0.0
    %335 = vmatpush1.msra.mxu0 0.0
    %336 = vmatprep.subr.mxu0 0.0
    %337 = vmatpush1.msra.mxu0 0.0
    %338 = vmatprep.mubr.f32.mxu0 0.0
    %339 = vmatmul.mubr.f32.gmra.mrb[0].mxu0 %v272
    %v340 = vpop.f32.mrb[0].mxu0
    %v341 = vadd.f32 %v269, %v340
    %v342 = vpop.f32.mrb[0].mxu0
    %343 = vdwg.mxu0
    %344 = vst [vmem:[#allocation10] sm:$0xff] %v341
    // Predicated region
    $region46: #{tpu_custom_call.1} parent=1 // pred_check
      _
    $region47: #{tpu_custom_call.1} parent=1 // pred_check_branch
      %346 = sbr.rel (0) target = $region49
    $region48: #{tpu_custom_call.1} parent=1 // pred_region
      %s348 = ssub.s32 128, 128
      %349 = vsyncadd [#allocation4], %s348
      %s351 = sshll.u32 [#allocation10], 4
      %s352 = int_to_ptr.vmem [resolvable:$true] %s351
      %354 = dma.vmem_to_hbm [thread:$0]  %s352, 128, %s7, [#allocation4]
    $region49: #{tpu_custom_call.1} parent=1 // pred_fallthru
      _
    // Predicated region
    $region50: #{tpu_custom_call.1} parent=1 // pred_check
      _
    $region51: #{tpu_custom_call.1} parent=1 // pred_check_branch
      %356 = sbr.rel (0) target = $region53
    $region52: #{tpu_custom_call.1} parent=1 // pred_region
      %357 = dma.done [#allocation4], 128
    $region53: #{tpu_custom_call.1} parent=1 // pred_fallthru
      _
    %358 = vsyncpa [#allocation3], 1
    %359 = vsyncpa [#allocation6], 1
    %360 = vsyncpa [#allocation9], 1
    %361 = vsyncpa [#allocation4], 1

</llo_original>
